<compile_context>
chip_gen: v7x
topology: tpu7x:2x2x1
jax: 0.10.0
libtpu: 0.0.40
codegen_flags: <defaults>
</compile_context>

<pallas_src>
import functools

import jax
import jax.numpy as jnp
from jax.experimental import pallas as pl
from jax.experimental.pallas import tpu as pltpu

LANE = 128
_MiB = 1024 * 1024


def _round_up(x, m):
    return ((x + m - 1) // m) * m


def _yolo_loss_kernel(pred_ref, gt_ref, out_ref, *, B, C, lambda_coord, lambda_noobj):
    f32 = jnp.float32
    # Channel rows (both tensors): 0=p, 1=x, 2=y, 3=w, 4=h, 5..=classes.
    gx = gt_ref[1]
    gy = gt_ref[2]
    gw = gt_ref[3]
    gh = gt_ref[4]

    # TODO(synk): intersection_over_union() is defined outside the provided module;
    # the standard YOLOv1 midpoint-format IoU (with 1e-6 in the denominator) is assumed.
    g_x1 = gx - gw * 0.5
    g_x2 = gx + gw * 0.5
    g_y1 = gy - gh * 0.5
    g_y2 = gy + gh * 0.5
    g_area = jnp.abs((g_x2 - g_x1) * (g_y2 - g_y1))

    # ---- Pass 1: responsible-box argmax as a running best (no divides, no lists). ----
    # iou_b > iou_best  <=>  inter_b * union_best > inter_best * union_b  (unions > 0).
    # Strict '>' keeps the lower index on ties (argmax first-wins).
    best_idx = jnp.zeros(g_area.shape, jnp.int32)
    best_inter = None
    best_union = None
    for b in range(B):
        px = pred_ref[5 * b + 1]
        py = pred_ref[5 * b + 2]
        pw = pred_ref[5 * b + 3]
        ph = pred_ref[5 * b + 4]
        p_x1 = px - pw * 0.5
        p_x2 = px + pw * 0.5
        p_y1 = py - ph * 0.5
        p_y2 = py + ph * 0.5
        ix = jnp.maximum(jnp.minimum(p_x2, g_x2) - jnp.maximum(p_x1, g_x1), 0.0)
        iy = jnp.maximum(jnp.minimum(p_y2, g_y2) - jnp.maximum(p_y1, g_y1), 0.0)
        inter = ix * iy
        union = jnp.abs((p_x2 - p_x1) * (p_y2 - p_y1)) + g_area - inter + 1e-6
        if b == 0:
            best_inter, best_union = inter, union
        else:
            better = inter * best_union > best_inter * union
            best_idx = jnp.where(better, jnp.int32(b), best_idx)
            best_inter = jnp.where(better, inter, best_inter)
            best_union = jnp.where(better, union, best_union)

    # ---- Pass 2: per-cell weighted squared errors (re-read pred channels from VMEM). ----
    gp = gt_ref[0]
    loss = jnp.zeros(g_area.shape, f32)
    for b in range(B):
        m = (best_idx == b).astype(f32)               # 0/1 responsible-box mask
        e_p = pred_ref[5 * b + 0] - gp                # objectness error (obj + noobj terms)
        dx = m * (pred_ref[5 * b + 1] - gx)           # fused masked coordinate diffs
        dy = m * (pred_ref[5 * b + 2] - gy)
        dw = m * (pred_ref[5 * b + 3] - gw)
        dh = m * (pred_ref[5 * b + 4] - gh)
        w_obj = m + lambda_noobj * (1.0 - m)          # obj weight if responsible, else noobj
        loss = loss + w_obj * (e_p * e_p) \
                    + lambda_coord * (dx * dx + dy * dy + dw * dw + dh * dh)

    # ---- Class loss, streamed over classes (no (C, rows, 128) temporary). ----
    # NOTE: the reference uses ground-truth channel 1 (the x coordinate) as I_i_obj;
    # reproduced as-is to match the PyTorch forward exactly.
    cls_acc = jnp.zeros(g_area.shape, f32)
    for c in range(C):
        d = pred_ref[5 * B + c] - gt_ref[5 + c]
        cls_acc = cls_acc + d * d
    loss = loss + (gx * gx) * cls_acc

    # ---- In-kernel reduction: (block_rows, 128) -> (8, 128) partial. ----
    # block_rows is always a multiple of 8, so this reshape splits whole sublane tiles
    # and the reduction is pure leading-dim elementwise adds (no cross-lane work).
    br = loss.shape[0]
    out_ref[0, :, :] = jnp.sum(loss.reshape(br // 8, 8, LANE), axis=0)


@functools.partial(
    jax.jit,
    static_argnames=("num_splits", "num_boxes", "num_classes",
                     "lambda_coord", "lambda_noobj", "vmem_budget_bytes"))
def yolo_loss(pred, ground_truth, *, num_splits=7, num_boxes=2, num_classes=20,
              lambda_coord=5.0, lambda_noobj=0.5, vmem_budget_bytes=32 * _MiB):
    S, B, C = num_splits, num_boxes, num_classes
    N = pred.shape[0]
    n_pc = B * 5 + C
    n_gc = 5 + C
    assert pred.shape == (N, n_pc, S, S)
    assert ground_truth.shape == (N, n_gc, S, S)

    cells = N * S * S
    rows = _round_up(-(-cells // LANE), 8)            # ceil(cells/128), 8-sublane aligned

    # Block sizing from the VMEM budget (double-buffered inputs), capped at 512 rows
    # so the working set stays well inside v7x's 64 MiB physical VMEM.
    bytes_per_row = 2 * (n_pc + n_gc) * LANE * 4
    block_rows = min(512, max(8, (vmem_budget_bytes // bytes_per_row) // 8 * 8))
    if rows <= block_rows:
        # Single grid step for realistic sizes; split in two when each half is still
        # large enough to amortize the per-step overhead (and feed both v7x cores).
        num_blocks = 2 if rows >= 256 else 1
    else:
        num_blocks = -(-rows // block_rows)
    block_rows = _round_up(-(-rows // num_blocks), 8)
    padded_rows = num_blocks * block_rows
    padded_cells = padded_rows * LANE

    # Scoped-VMEM limit: double-buffered inputs + headroom for in-kernel temporaries,
    # kept below v7x's 64 MiB physical VMEM.
    vmem_limit = int(min(48 * _MiB, bytes_per_row * block_rows + 8 * _MiB))

    def to_kernel_layout(x, n_ch):
        # NCHW -> (channels, cells) -> zero-pad cells -> (channels, rows, 128).
        # Zero padding is loss-neutral (all masked diffs / indicators are 0).
        # Stays inside this jitted program so it fuses with the kernel launch.
        x = jnp.transpose(x, (1, 0, 2, 3)).reshape(n_ch, cells).astype(jnp.float32)
        x = jnp.pad(x, ((0, 0), (0, padded_cells - cells)))
        return x.reshape(n_ch, padded_rows, LANE)

    pred_k = to_kernel_layout(pred, n_pc)
    gt_k = to_kernel_layout(ground_truth, n_gc)

    kernel = functools.partial(
        _yolo_loss_kernel, B=B, C=C,
        lambda_coord=float(lambda_coord), lambda_noobj=float(lambda_noobj))

    partials = pl.pallas_call(
        kernel,
        out_shape=jax.ShapeDtypeStruct((num_blocks, 8, LANE), jnp.float32),
        grid=(num_blocks,),
        in_specs=[pl.BlockSpec((n_pc, block_rows, LANE), lambda i: (0, i, 0)),
                  pl.BlockSpec((n_gc, block_rows, LANE), lambda i: (0, i, 0))],
        out_specs=pl.BlockSpec((1, 8, LANE), lambda i: (i, 0, 0)),
        compiler_params=pltpu.CompilerParams(
            dimension_semantics=("parallel",),
            vmem_limit_bytes=vmem_limit),
    )(pred_k, gt_k)

    # Tiny final reduction over (num_blocks, 8, 128) partials.
    return jnp.sum(partials)


def yolo_loss_ref(pred, gt, *, S=7, B=2, C=20, lambda_coord=5.0, lambda_noobj=0.5):
    """Pure-JAX reference mirroring the PyTorch forward pass."""
    pred = jnp.transpose(pred, (0, 2, 3, 1))
    gt = jnp.transpose(gt, (0, 2, 3, 1))
    pred_boxes = jnp.stack([pred[..., b * 5:(b + 1) * 5] for b in range(B)])  # (B,N,S,S,5)
    gt_boxes = gt[..., :5]

    def iou(bp, bg):
        p_x1 = bp[..., 0] - bp[..., 2] / 2; p_y1 = bp[..., 1] - bp[..., 3] / 2
        p_x2 = bp[..., 0] + bp[..., 2] / 2; p_y2 = bp[..., 1] + bp[..., 3] / 2
        g_x1 = bg[..., 0] - bg[..., 2] / 2; g_y1 = bg[..., 1] - bg[..., 3] / 2
        g_x2 = bg[..., 0] + bg[..., 2] / 2; g_y2 = bg[..., 1] + bg[..., 3] / 2
        x1 = jnp.maximum(p_x1, g_x1); y1 = jnp.maximum(p_y1, g_y1)
        x2 = jnp.minimum(p_x2, g_x2); y2 = jnp.minimum(p_y2, g_y2)
        inter = jnp.clip(x2 - x1, 0.0) * jnp.clip(y2 - y1, 0.0)
        pa = jnp.abs((p_x2 - p_x1) * (p_y2 - p_y1))
        ga = jnp.abs((g_x2 - g_x1) * (g_y2 - g_y1))
        return inter / (pa + ga - inter + 1e-6)

    ious = iou(pred_boxes[..., 1:], gt_boxes[..., 1:])    # (B,N,S,S)
    chosen = jnp.argmax(ious, axis=0)
    I_ij = (jnp.arange(B).reshape(B, 1, 1, 1) == chosen).astype(jnp.float32)
    I_i = gt[..., 1]
    mse = lambda a, b: jnp.sum((a - b) ** 2)
    bx = mse(I_ij * pred_boxes[..., 1], I_ij * gt_boxes[..., 1])
    by = mse(I_ij * pred_boxes[..., 2], I_ij * gt_boxes[..., 2])
    bw = mse(I_ij * pred_boxes[..., 3], I_ij * gt_boxes[..., 3])
    bh = mse(I_ij * pred_boxes[..., 4], I_ij * gt_boxes[..., 4])
    obj = mse(I_ij * pred_boxes[..., 0], I_ij * gt_boxes[..., 0])
    noobj = mse((1.0 - I_ij) * pred_boxes[..., 0], (1.0 - I_ij) * gt_boxes[..., 0])
    cls = mse(I_i[..., None] * pred[..., B * 5:], I_i[..., None] * gt[..., 5:])
    return lambda_coord * (bx + by + bw + bh) + obj + lambda_noobj * noobj + cls


if __name__ == "__main__":
    key = jax.random.PRNGKey(0)
    N, S, B, C = 2, 7, 2, 20
    kp, kg = jax.random.split(key)
    pred = jax.random.normal(kp, (N, B * 5 + C, S, S), dtype=jnp.float32)
    gt = jax.random.uniform(kg, (N, 5 + C, S, S), dtype=jnp.float32)

    loss = yolo_loss(pred, gt, num_splits=S, num_boxes=B, num_classes=C)
    loss = jax.block_until_ready(loss)
    ref = yolo_loss_ref(pred, gt, S=S, B=B, C=C)
    assert jnp.allclose(loss, ref, rtol=1e-3, atol=1e-3), (float(loss), float(ref))

    # Exercise the multi-block "parallel" grid path (small VMEM budget -> 2 blocks).
    N2 = 32
    kp2, kg2 = jax.random.split(kg)
    pred2 = jax.random.normal(kp2, (N2, B * 5 + C, S, S), dtype=jnp.float32)
    gt2 = jax.random.uniform(kg2, (N2, 5 + C, S, S), dtype=jnp.float32)
    loss2 = yolo_loss(pred2, gt2, num_splits=S, num_boxes=B, num_classes=C,
                      vmem_budget_bytes=512 * 1024)
    loss2 = jax.block_until_ready(loss2)
    ref2 = yolo_loss_ref(pred2, gt2, S=S, B=B, C=C)
    assert jnp.allclose(loss2, ref2, rtol=1e-3, atol=1e-3), (float(loss2), float(ref2))

    print("KERNEL_OK")
</pallas_src>

<mosaic_0001>
module attributes {stable_mosaic.version = 11 : i64} {
  func.func @_yolo_loss_kernel(%arg0: i32, %arg1: memref<30x8x128xf32, #tpu.memory_space<vmem>>, %arg2: memref<25x8x128xf32, #tpu.memory_space<vmem>>, %arg3: memref<1x8x128xf32, #tpu.memory_space<vmem>>) attributes {dimension_semantics = [#tpu.dimension_semantics<parallel>], iteration_bounds = array<i64: 1>, scalar_prefetch = 0 : i64, scratch_operands = 0 : i64, tpu.core_type = #tpu.core_type<tc>, window_params = [{transform_indices = @transform_0, window_bounds = array<i64: 30, 8, 128>}, {transform_indices = @transform_1, window_bounds = array<i64: 25, 8, 128>}, {transform_indices = @transform_2, window_bounds = array<i64: 1, 8, 128>}]} {
    %c1 = arith.constant 1 : index
    %c0 = arith.constant 0 : index
    %c0_0 = arith.constant 0 : index
    %0 = vector.load %arg2[%c1, %c0, %c0_0] : memref<25x8x128xf32, #tpu.memory_space<vmem>>, vector<1x8x128xf32>
    %1 = vector.shape_cast %0 : vector<1x8x128xf32> to vector<8x128xf32>
    %c2 = arith.constant 2 : index
    %c0_1 = arith.constant 0 : index
    %c0_2 = arith.constant 0 : index
    %2 = vector.load %arg2[%c2, %c0_1, %c0_2] : memref<25x8x128xf32, #tpu.memory_space<vmem>>, vector<1x8x128xf32>
    %3 = vector.shape_cast %2 : vector<1x8x128xf32> to vector<8x128xf32>
    %c3 = arith.constant 3 : index
    %c0_3 = arith.constant 0 : index
    %c0_4 = arith.constant 0 : index
    %4 = vector.load %arg2[%c3, %c0_3, %c0_4] : memref<25x8x128xf32, #tpu.memory_space<vmem>>, vector<1x8x128xf32>
    %5 = vector.shape_cast %4 : vector<1x8x128xf32> to vector<8x128xf32>
    %c4 = arith.constant 4 : index
    %c0_5 = arith.constant 0 : index
    %c0_6 = arith.constant 0 : index
    %6 = vector.load %arg2[%c4, %c0_5, %c0_6] : memref<25x8x128xf32, #tpu.memory_space<vmem>>, vector<1x8x128xf32>
    %7 = vector.shape_cast %6 : vector<1x8x128xf32> to vector<8x128xf32>
    %cst = arith.constant 5.000000e-01 : f32
    %8 = vector.broadcast %cst : f32 to vector<8x128xf32>
    %9 = arith.mulf %5, %8 : vector<8x128xf32>
    %10 = arith.subf %1, %9 : vector<8x128xf32>
    %cst_7 = arith.constant 5.000000e-01 : f32
    %11 = vector.broadcast %cst_7 : f32 to vector<8x128xf32>
    %12 = arith.mulf %5, %11 : vector<8x128xf32>
    %13 = arith.addf %1, %12 : vector<8x128xf32>
    %cst_8 = arith.constant 5.000000e-01 : f32
    %14 = vector.broadcast %cst_8 : f32 to vector<8x128xf32>
    %15 = arith.mulf %7, %14 : vector<8x128xf32>
    %16 = arith.subf %3, %15 : vector<8x128xf32>
    %cst_9 = arith.constant 5.000000e-01 : f32
    %17 = vector.broadcast %cst_9 : f32 to vector<8x128xf32>
    %18 = arith.mulf %7, %17 : vector<8x128xf32>
    %19 = arith.addf %3, %18 : vector<8x128xf32>
    %20 = arith.subf %13, %10 : vector<8x128xf32>
    %21 = arith.subf %19, %16 : vector<8x128xf32>
    %22 = arith.mulf %20, %21 : vector<8x128xf32>
    %23 = math.absf %22 : vector<8x128xf32>
    %c0_i32 = arith.constant 0 : i32
    %24 = vector.broadcast %c0_i32 : i32 to vector<8x128xi32>
    %c1_10 = arith.constant 1 : index
    %c0_11 = arith.constant 0 : index
    %c0_12 = arith.constant 0 : index
    %25 = vector.load %arg1[%c1_10, %c0_11, %c0_12] : memref<30x8x128xf32, #tpu.memory_space<vmem>>, vector<1x8x128xf32>
    %26 = vector.shape_cast %25 : vector<1x8x128xf32> to vector<8x128xf32>
    %c2_13 = arith.constant 2 : index
    %c0_14 = arith.constant 0 : index
    %c0_15 = arith.constant 0 : index
    %27 = vector.load %arg1[%c2_13, %c0_14, %c0_15] : memref<30x8x128xf32, #tpu.memory_space<vmem>>, vector<1x8x128xf32>
    %28 = vector.shape_cast %27 : vector<1x8x128xf32> to vector<8x128xf32>
    %c3_16 = arith.constant 3 : index
    %c0_17 = arith.constant 0 : index
    %c0_18 = arith.constant 0 : index
    %29 = vector.load %arg1[%c3_16, %c0_17, %c0_18] : memref<30x8x128xf32, #tpu.memory_space<vmem>>, vector<1x8x128xf32>
    %30 = vector.shape_cast %29 : vector<1x8x128xf32> to vector<8x128xf32>
    %c4_19 = arith.constant 4 : index
    %c0_20 = arith.constant 0 : index
    %c0_21 = arith.constant 0 : index
    %31 = vector.load %arg1[%c4_19, %c0_20, %c0_21] : memref<30x8x128xf32, #tpu.memory_space<vmem>>, vector<1x8x128xf32>
    %32 = vector.shape_cast %31 : vector<1x8x128xf32> to vector<8x128xf32>
    %cst_22 = arith.constant 5.000000e-01 : f32
    %33 = vector.broadcast %cst_22 : f32 to vector<8x128xf32>
    %34 = arith.mulf %30, %33 : vector<8x128xf32>
    %35 = arith.subf %26, %34 : vector<8x128xf32>
    %cst_23 = arith.constant 5.000000e-01 : f32
    %36 = vector.broadcast %cst_23 : f32 to vector<8x128xf32>
    %37 = arith.mulf %30, %36 : vector<8x128xf32>
    %38 = arith.addf %26, %37 : vector<8x128xf32>
    %cst_24 = arith.constant 5.000000e-01 : f32
    %39 = vector.broadcast %cst_24 : f32 to vector<8x128xf32>
    %40 = arith.mulf %32, %39 : vector<8x128xf32>
    %41 = arith.subf %28, %40 : vector<8x128xf32>
    %cst_25 = arith.constant 5.000000e-01 : f32
    %42 = vector.broadcast %cst_25 : f32 to vector<8x128xf32>
    %43 = arith.mulf %32, %42 : vector<8x128xf32>
    %44 = arith.addf %28, %43 : vector<8x128xf32>
    %45 = arith.minimumf %38, %13 : vector<8x128xf32>
    %46 = arith.maximumf %35, %10 : vector<8x128xf32>
    %47 = arith.subf %45, %46 : vector<8x128xf32>
    %cst_26 = arith.constant 0.000000e+00 : f32
    %48 = vector.broadcast %cst_26 : f32 to vector<8x128xf32>
    %49 = arith.maximumf %47, %48 : vector<8x128xf32>
    %50 = arith.minimumf %44, %19 : vector<8x128xf32>
    %51 = arith.maximumf %41, %16 : vector<8x128xf32>
    %52 = arith.subf %50, %51 : vector<8x128xf32>
    %cst_27 = arith.constant 0.000000e+00 : f32
    %53 = vector.broadcast %cst_27 : f32 to vector<8x128xf32>
    %54 = arith.maximumf %52, %53 : vector<8x128xf32>
    %55 = arith.mulf %49, %54 : vector<8x128xf32>
    %56 = arith.subf %38, %35 : vector<8x128xf32>
    %57 = arith.subf %44, %41 : vector<8x128xf32>
    %58 = arith.mulf %56, %57 : vector<8x128xf32>
    %59 = math.absf %58 : vector<8x128xf32>
    %60 = arith.addf %59, %23 : vector<8x128xf32>
    %61 = arith.subf %60, %55 : vector<8x128xf32>
    %cst_28 = arith.constant 9.99999997E-7 : f32
    %62 = vector.broadcast %cst_28 : f32 to vector<8x128xf32>
    %63 = arith.addf %61, %62 : vector<8x128xf32>
    %c6 = arith.constant 6 : index
    %c0_29 = arith.constant 0 : index
    %c0_30 = arith.constant 0 : index
    %64 = vector.load %arg1[%c6, %c0_29, %c0_30] : memref<30x8x128xf32, #tpu.memory_space<vmem>>, vector<1x8x128xf32>
    %65 = vector.shape_cast %64 : vector<1x8x128xf32> to vector<8x128xf32>
    %c7 = arith.constant 7 : index
    %c0_31 = arith.constant 0 : index
    %c0_32 = arith.constant 0 : index
    %66 = vector.load %arg1[%c7, %c0_31, %c0_32] : memref<30x8x128xf32, #tpu.memory_space<vmem>>, vector<1x8x128xf32>
    %67 = vector.shape_cast %66 : vector<1x8x128xf32> to vector<8x128xf32>
    %c8 = arith.constant 8 : index
    %c0_33 = arith.constant 0 : index
    %c0_34 = arith.constant 0 : index
    %68 = vector.load %arg1[%c8, %c0_33, %c0_34] : memref<30x8x128xf32, #tpu.memory_space<vmem>>, vector<1x8x128xf32>
    %69 = vector.shape_cast %68 : vector<1x8x128xf32> to vector<8x128xf32>
    %c9 = arith.constant 9 : index
    %c0_35 = arith.constant 0 : index
    %c0_36 = arith.constant 0 : index
    %70 = vector.load %arg1[%c9, %c0_35, %c0_36] : memref<30x8x128xf32, #tpu.memory_space<vmem>>, vector<1x8x128xf32>
    %71 = vector.shape_cast %70 : vector<1x8x128xf32> to vector<8x128xf32>
    %cst_37 = arith.constant 5.000000e-01 : f32
    %72 = vector.broadcast %cst_37 : f32 to vector<8x128xf32>
    %73 = arith.mulf %69, %72 : vector<8x128xf32>
    %74 = arith.subf %65, %73 : vector<8x128xf32>
    %cst_38 = arith.constant 5.000000e-01 : f32
    %75 = vector.broadcast %cst_38 : f32 to vector<8x128xf32>
    %76 = arith.mulf %69, %75 : vector<8x128xf32>
    %77 = arith.addf %65, %76 : vector<8x128xf32>
    %cst_39 = arith.constant 5.000000e-01 : f32
    %78 = vector.broadcast %cst_39 : f32 to vector<8x128xf32>
    %79 = arith.mulf %71, %78 : vector<8x128xf32>
    %80 = arith.subf %67, %79 : vector<8x128xf32>
    %cst_40 = arith.constant 5.000000e-01 : f32
    %81 = vector.broadcast %cst_40 : f32 to vector<8x128xf32>
    %82 = arith.mulf %71, %81 : vector<8x128xf32>
    %83 = arith.addf %67, %82 : vector<8x128xf32>
    %84 = arith.minimumf %77, %13 : vector<8x128xf32>
    %85 = arith.maximumf %74, %10 : vector<8x128xf32>
    %86 = arith.subf %84, %85 : vector<8x128xf32>
    %cst_41 = arith.constant 0.000000e+00 : f32
    %87 = vector.broadcast %cst_41 : f32 to vector<8x128xf32>
    %88 = arith.maximumf %86, %87 : vector<8x128xf32>
    %89 = arith.minimumf %83, %19 : vector<8x128xf32>
    %90 = arith.maximumf %80, %16 : vector<8x128xf32>
    %91 = arith.subf %89, %90 : vector<8x128xf32>
    %cst_42 = arith.constant 0.000000e+00 : f32
    %92 = vector.broadcast %cst_42 : f32 to vector<8x128xf32>
    %93 = arith.maximumf %91, %92 : vector<8x128xf32>
    %94 = arith.mulf %88, %93 : vector<8x128xf32>
    %95 = arith.subf %77, %74 : vector<8x128xf32>
    %96 = arith.subf %83, %80 : vector<8x128xf32>
    %97 = arith.mulf %95, %96 : vector<8x128xf32>
    %98 = math.absf %97 : vector<8x128xf32>
    %99 = arith.addf %98, %23 : vector<8x128xf32>
    %100 = arith.subf %99, %94 : vector<8x128xf32>
    %cst_43 = arith.constant 9.99999997E-7 : f32
    %101 = vector.broadcast %cst_43 : f32 to vector<8x128xf32>
    %102 = arith.addf %100, %101 : vector<8x128xf32>
    %103 = arith.mulf %94, %63 : vector<8x128xf32>
    %104 = arith.mulf %55, %102 : vector<8x128xf32>
    %105 = arith.cmpf ogt, %103, %104 : vector<8x128xf32>
    %c1_i32 = arith.constant 1 : i32
    %106 = vector.broadcast %c1_i32 : i32 to vector<8x128xi32>
    %107 = arith.select %105, %106, %24 : vector<8x128xi1>, vector<8x128xi32>
    %c0_44 = arith.constant 0 : index
    %c0_45 = arith.constant 0 : index
    %c0_46 = arith.constant 0 : index
    %108 = vector.load %arg2[%c0_44, %c0_45, %c0_46] : memref<25x8x128xf32, #tpu.memory_space<vmem>>, vector<1x8x128xf32>
    %109 = vector.shape_cast %108 : vector<1x8x128xf32> to vector<8x128xf32>
    %cst_47 = arith.constant 0.000000e+00 : f32
    %110 = vector.broadcast %cst_47 : f32 to vector<8x128xf32>
    %c0_i32_48 = arith.constant 0 : i32
    %111 = vector.broadcast %c0_i32_48 : i32 to vector<8x128xi32>
    %112 = arith.cmpi eq, %107, %111 : vector<8x128xi32>
    %113 = arith.extui %112 : vector<8x128xi1> to vector<8x128xi32>
    %114 = arith.sitofp %113 : vector<8x128xi32> to vector<8x128xf32>
    %c0_49 = arith.constant 0 : index
    %c0_50 = arith.constant 0 : index
    %c0_51 = arith.constant 0 : index
    %115 = vector.load %arg1[%c0_49, %c0_50, %c0_51] : memref<30x8x128xf32, #tpu.memory_space<vmem>>, vector<1x8x128xf32>
    %116 = vector.shape_cast %115 : vector<1x8x128xf32> to vector<8x128xf32>
    %117 = arith.subf %116, %109 : vector<8x128xf32>
    %c1_52 = arith.constant 1 : index
    %c0_53 = arith.constant 0 : index
    %c0_54 = arith.constant 0 : index
    %118 = vector.load %arg1[%c1_52, %c0_53, %c0_54] : memref<30x8x128xf32, #tpu.memory_space<vmem>>, vector<1x8x128xf32>
    %119 = vector.shape_cast %118 : vector<1x8x128xf32> to vector<8x128xf32>
    %120 = arith.subf %119, %1 : vector<8x128xf32>
    %121 = arith.mulf %114, %120 : vector<8x128xf32>
    %c2_55 = arith.constant 2 : index
    %c0_56 = arith.constant 0 : index
    %c0_57 = arith.constant 0 : index
    %122 = vector.load %arg1[%c2_55, %c0_56, %c0_57] : memref<30x8x128xf32, #tpu.memory_space<vmem>>, vector<1x8x128xf32>
    %123 = vector.shape_cast %122 : vector<1x8x128xf32> to vector<8x128xf32>
    %124 = arith.subf %123, %3 : vector<8x128xf32>
    %125 = arith.mulf %114, %124 : vector<8x128xf32>
    %c3_58 = arith.constant 3 : index
    %c0_59 = arith.constant 0 : index
    %c0_60 = arith.constant 0 : index
    %126 = vector.load %arg1[%c3_58, %c0_59, %c0_60] : memref<30x8x128xf32, #tpu.memory_space<vmem>>, vector<1x8x128xf32>
    %127 = vector.shape_cast %126 : vector<1x8x128xf32> to vector<8x128xf32>
    %128 = arith.subf %127, %5 : vector<8x128xf32>
    %129 = arith.mulf %114, %128 : vector<8x128xf32>
    %c4_61 = arith.constant 4 : index
    %c0_62 = arith.constant 0 : index
    %c0_63 = arith.constant 0 : index
    %130 = vector.load %arg1[%c4_61, %c0_62, %c0_63] : memref<30x8x128xf32, #tpu.memory_space<vmem>>, vector<1x8x128xf32>
    %131 = vector.shape_cast %130 : vector<1x8x128xf32> to vector<8x128xf32>
    %132 = arith.subf %131, %7 : vector<8x128xf32>
    %133 = arith.mulf %114, %132 : vector<8x128xf32>
    %cst_64 = arith.constant 1.000000e+00 : f32
    %134 = vector.broadcast %cst_64 : f32 to vector<8x128xf32>
    %135 = arith.subf %134, %114 : vector<8x128xf32>
    %cst_65 = arith.constant 5.000000e-01 : f32
    %136 = vector.broadcast %cst_65 : f32 to vector<8x128xf32>
    %137 = arith.mulf %136, %135 : vector<8x128xf32>
    %138 = arith.addf %114, %137 : vector<8x128xf32>
    %139 = arith.mulf %117, %117 : vector<8x128xf32>
    %140 = arith.mulf %138, %139 : vector<8x128xf32>
    %141 = arith.addf %110, %140 : vector<8x128xf32>
    %142 = arith.mulf %121, %121 : vector<8x128xf32>
    %143 = arith.mulf %125, %125 : vector<8x128xf32>
    %144 = arith.addf %142, %143 : vector<8x128xf32>
    %145 = arith.mulf %129, %129 : vector<8x128xf32>
    %146 = arith.addf %144, %145 : vector<8x128xf32>
    %147 = arith.mulf %133, %133 : vector<8x128xf32>
    %148 = arith.addf %146, %147 : vector<8x128xf32>
    %cst_66 = arith.constant 5.000000e+00 : f32
    %149 = vector.broadcast %cst_66 : f32 to vector<8x128xf32>
    %150 = arith.mulf %149, %148 : vector<8x128xf32>
    %151 = arith.addf %141, %150 : vector<8x128xf32>
    %c1_i32_67 = arith.constant 1 : i32
    %152 = vector.broadcast %c1_i32_67 : i32 to vector<8x128xi32>
    %153 = arith.cmpi eq, %107, %152 : vector<8x128xi32>
    %154 = arith.extui %153 : vector<8x128xi1> to vector<8x128xi32>
    %155 = arith.sitofp %154 : vector<8x128xi32> to vector<8x128xf32>
    %c5 = arith.constant 5 : index
    %c0_68 = arith.constant 0 : index
    %c0_69 = arith.constant 0 : index
    %156 = vector.load %arg1[%c5, %c0_68, %c0_69] : memref<30x8x128xf32, #tpu.memory_space<vmem>>, vector<1x8x128xf32>
    %157 = vector.shape_cast %156 : vector<1x8x128xf32> to vector<8x128xf32>
    %158 = arith.subf %157, %109 : vector<8x128xf32>
    %c6_70 = arith.constant 6 : index
    %c0_71 = arith.constant 0 : index
    %c0_72 = arith.constant 0 : index
    %159 = vector.load %arg1[%c6_70, %c0_71, %c0_72] : memref<30x8x128xf32, #tpu.memory_space<vmem>>, vector<1x8x128xf32>
    %160 = vector.shape_cast %159 : vector<1x8x128xf32> to vector<8x128xf32>
    %161 = arith.subf %160, %1 : vector<8x128xf32>
    %162 = arith.mulf %155, %161 : vector<8x128xf32>
    %c7_73 = arith.constant 7 : index
    %c0_74 = arith.constant 0 : index
    %c0_75 = arith.constant 0 : index
    %163 = vector.load %arg1[%c7_73, %c0_74, %c0_75] : memref<30x8x128xf32, #tpu.memory_space<vmem>>, vector<1x8x128xf32>
    %164 = vector.shape_cast %163 : vector<1x8x128xf32> to vector<8x128xf32>
    %165 = arith.subf %164, %3 : vector<8x128xf32>
    %166 = arith.mulf %155, %165 : vector<8x128xf32>
    %c8_76 = arith.constant 8 : index
    %c0_77 = arith.constant 0 : index
    %c0_78 = arith.constant 0 : index
    %167 = vector.load %arg1[%c8_76, %c0_77, %c0_78] : memref<30x8x128xf32, #tpu.memory_space<vmem>>, vector<1x8x128xf32>
    %168 = vector.shape_cast %167 : vector<1x8x128xf32> to vector<8x128xf32>
    %169 = arith.subf %168, %5 : vector<8x128xf32>
    %170 = arith.mulf %155, %169 : vector<8x128xf32>
    %c9_79 = arith.constant 9 : index
    %c0_80 = arith.constant 0 : index
    %c0_81 = arith.constant 0 : index
    %171 = vector.load %arg1[%c9_79, %c0_80, %c0_81] : memref<30x8x128xf32, #tpu.memory_space<vmem>>, vector<1x8x128xf32>
    %172 = vector.shape_cast %171 : vector<1x8x128xf32> to vector<8x128xf32>
    %173 = arith.subf %172, %7 : vector<8x128xf32>
    %174 = arith.mulf %155, %173 : vector<8x128xf32>
    %cst_82 = arith.constant 1.000000e+00 : f32
    %175 = vector.broadcast %cst_82 : f32 to vector<8x128xf32>
    %176 = arith.subf %175, %155 : vector<8x128xf32>
    %cst_83 = arith.constant 5.000000e-01 : f32
    %177 = vector.broadcast %cst_83 : f32 to vector<8x128xf32>
    %178 = arith.mulf %177, %176 : vector<8x128xf32>
    %179 = arith.addf %155, %178 : vector<8x128xf32>
    %180 = arith.mulf %158, %158 : vector<8x128xf32>
    %181 = arith.mulf %179, %180 : vector<8x128xf32>
    %182 = arith.addf %151, %181 : vector<8x128xf32>
    %183 = arith.mulf %162, %162 : vector<8x128xf32>
    %184 = arith.mulf %166, %166 : vector<8x128xf32>
    %185 = arith.addf %183, %184 : vector<8x128xf32>
    %186 = arith.mulf %170, %170 : vector<8x128xf32>
    %187 = arith.addf %185, %186 : vector<8x128xf32>
    %188 = arith.mulf %174, %174 : vector<8x128xf32>
    %189 = arith.addf %187, %188 : vector<8x128xf32>
    %cst_84 = arith.constant 5.000000e+00 : f32
    %190 = vector.broadcast %cst_84 : f32 to vector<8x128xf32>
    %191 = arith.mulf %190, %189 : vector<8x128xf32>
    %192 = arith.addf %182, %191 : vector<8x128xf32>
    %cst_85 = arith.constant 0.000000e+00 : f32
    %193 = vector.broadcast %cst_85 : f32 to vector<8x128xf32>
    %c10 = arith.constant 10 : index
    %c0_86 = arith.constant 0 : index
    %c0_87 = arith.constant 0 : index
    %194 = vector.load %arg1[%c10, %c0_86, %c0_87] : memref<30x8x128xf32, #tpu.memory_space<vmem>>, vector<1x8x128xf32>
    %195 = vector.shape_cast %194 : vector<1x8x128xf32> to vector<8x128xf32>
    %c5_88 = arith.constant 5 : index
    %c0_89 = arith.constant 0 : index
    %c0_90 = arith.constant 0 : index
    %196 = vector.load %arg2[%c5_88, %c0_89, %c0_90] : memref<25x8x128xf32, #tpu.memory_space<vmem>>, vector<1x8x128xf32>
    %197 = vector.shape_cast %196 : vector<1x8x128xf32> to vector<8x128xf32>
    %198 = arith.subf %195, %197 : vector<8x128xf32>
    %199 = arith.mulf %198, %198 : vector<8x128xf32>
    %200 = arith.addf %193, %199 : vector<8x128xf32>
    %c11 = arith.constant 11 : index
    %c0_91 = arith.constant 0 : index
    %c0_92 = arith.constant 0 : index
    %201 = vector.load %arg1[%c11, %c0_91, %c0_92] : memref<30x8x128xf32, #tpu.memory_space<vmem>>, vector<1x8x128xf32>
    %202 = vector.shape_cast %201 : vector<1x8x128xf32> to vector<8x128xf32>
    %c6_93 = arith.constant 6 : index
    %c0_94 = arith.constant 0 : index
    %c0_95 = arith.constant 0 : index
    %203 = vector.load %arg2[%c6_93, %c0_94, %c0_95] : memref<25x8x128xf32, #tpu.memory_space<vmem>>, vector<1x8x128xf32>
    %204 = vector.shape_cast %203 : vector<1x8x128xf32> to vector<8x128xf32>
    %205 = arith.subf %202, %204 : vector<8x128xf32>
    %206 = arith.mulf %205, %205 : vector<8x128xf32>
    %207 = arith.addf %200, %206 : vector<8x128xf32>
    %c12 = arith.constant 12 : index
    %c0_96 = arith.constant 0 : index
    %c0_97 = arith.constant 0 : index
    %208 = vector.load %arg1[%c12, %c0_96, %c0_97] : memref<30x8x128xf32, #tpu.memory_space<vmem>>, vector<1x8x128xf32>
    %209 = vector.shape_cast %208 : vector<1x8x128xf32> to vector<8x128xf32>
    %c7_98 = arith.constant 7 : index
    %c0_99 = arith.constant 0 : index
    %c0_100 = arith.constant 0 : index
    %210 = vector.load %arg2[%c7_98, %c0_99, %c0_100] : memref<25x8x128xf32, #tpu.memory_space<vmem>>, vector<1x8x128xf32>
    %211 = vector.shape_cast %210 : vector<1x8x128xf32> to vector<8x128xf32>
    %212 = arith.subf %209, %211 : vector<8x128xf32>
    %213 = arith.mulf %212, %212 : vector<8x128xf32>
    %214 = arith.addf %207, %213 : vector<8x128xf32>
    %c13 = arith.constant 13 : index
    %c0_101 = arith.constant 0 : index
    %c0_102 = arith.constant 0 : index
    %215 = vector.load %arg1[%c13, %c0_101, %c0_102] : memref<30x8x128xf32, #tpu.memory_space<vmem>>, vector<1x8x128xf32>
    %216 = vector.shape_cast %215 : vector<1x8x128xf32> to vector<8x128xf32>
    %c8_103 = arith.constant 8 : index
    %c0_104 = arith.constant 0 : index
    %c0_105 = arith.constant 0 : index
    %217 = vector.load %arg2[%c8_103, %c0_104, %c0_105] : memref<25x8x128xf32, #tpu.memory_space<vmem>>, vector<1x8x128xf32>
    %218 = vector.shape_cast %217 : vector<1x8x128xf32> to vector<8x128xf32>
    %219 = arith.subf %216, %218 : vector<8x128xf32>
    %220 = arith.mulf %219, %219 : vector<8x128xf32>
    %221 = arith.addf %214, %220 : vector<8x128xf32>
    %c14 = arith.constant 14 : index
    %c0_106 = arith.constant 0 : index
    %c0_107 = arith.constant 0 : index
    %222 = vector.load %arg1[%c14, %c0_106, %c0_107] : memref<30x8x128xf32, #tpu.memory_space<vmem>>, vector<1x8x128xf32>
    %223 = vector.shape_cast %222 : vector<1x8x128xf32> to vector<8x128xf32>
    %c9_108 = arith.constant 9 : index
    %c0_109 = arith.constant 0 : index
    %c0_110 = arith.constant 0 : index
    %224 = vector.load %arg2[%c9_108, %c0_109, %c0_110] : memref<25x8x128xf32, #tpu.memory_space<vmem>>, vector<1x8x128xf32>
    %225 = vector.shape_cast %224 : vector<1x8x128xf32> to vector<8x128xf32>
    %226 = arith.subf %223, %225 : vector<8x128xf32>
    %227 = arith.mulf %226, %226 : vector<8x128xf32>
    %228 = arith.addf %221, %227 : vector<8x128xf32>
    %c15 = arith.constant 15 : index
    %c0_111 = arith.constant 0 : index
    %c0_112 = arith.constant 0 : index
    %229 = vector.load %arg1[%c15, %c0_111, %c0_112] : memref<30x8x128xf32, #tpu.memory_space<vmem>>, vector<1x8x128xf32>
    %230 = vector.shape_cast %229 : vector<1x8x128xf32> to vector<8x128xf32>
    %c10_113 = arith.constant 10 : index
    %c0_114 = arith.constant 0 : index
    %c0_115 = arith.constant 0 : index
    %231 = vector.load %arg2[%c10_113, %c0_114, %c0_115] : memref<25x8x128xf32, #tpu.memory_space<vmem>>, vector<1x8x128xf32>
    %232 = vector.shape_cast %231 : vector<1x8x128xf32> to vector<8x128xf32>
    %233 = arith.subf %230, %232 : vector<8x128xf32>
    %234 = arith.mulf %233, %233 : vector<8x128xf32>
    %235 = arith.addf %228, %234 : vector<8x128xf32>
    %c16 = arith.constant 16 : index
    %c0_116 = arith.constant 0 : index
    %c0_117 = arith.constant 0 : index
    %236 = vector.load %arg1[%c16, %c0_116, %c0_117] : memref<30x8x128xf32, #tpu.memory_space<vmem>>, vector<1x8x128xf32>
    %237 = vector.shape_cast %236 : vector<1x8x128xf32> to vector<8x128xf32>
    %c11_118 = arith.constant 11 : index
    %c0_119 = arith.constant 0 : index
    %c0_120 = arith.constant 0 : index
    %238 = vector.load %arg2[%c11_118, %c0_119, %c0_120] : memref<25x8x128xf32, #tpu.memory_space<vmem>>, vector<1x8x128xf32>
    %239 = vector.shape_cast %238 : vector<1x8x128xf32> to vector<8x128xf32>
    %240 = arith.subf %237, %239 : vector<8x128xf32>
    %241 = arith.mulf %240, %240 : vector<8x128xf32>
    %242 = arith.addf %235, %241 : vector<8x128xf32>
    %c17 = arith.constant 17 : index
    %c0_121 = arith.constant 0 : index
    %c0_122 = arith.constant 0 : index
    %243 = vector.load %arg1[%c17, %c0_121, %c0_122] : memref<30x8x128xf32, #tpu.memory_space<vmem>>, vector<1x8x128xf32>
    %244 = vector.shape_cast %243 : vector<1x8x128xf32> to vector<8x128xf32>
    %c12_123 = arith.constant 12 : index
    %c0_124 = arith.constant 0 : index
    %c0_125 = arith.constant 0 : index
    %245 = vector.load %arg2[%c12_123, %c0_124, %c0_125] : memref<25x8x128xf32, #tpu.memory_space<vmem>>, vector<1x8x128xf32>
    %246 = vector.shape_cast %245 : vector<1x8x128xf32> to vector<8x128xf32>
    %247 = arith.subf %244, %246 : vector<8x128xf32>
    %248 = arith.mulf %247, %247 : vector<8x128xf32>
    %249 = arith.addf %242, %248 : vector<8x128xf32>
    %c18 = arith.constant 18 : index
    %c0_126 = arith.constant 0 : index
    %c0_127 = arith.constant 0 : index
    %250 = vector.load %arg1[%c18, %c0_126, %c0_127] : memref<30x8x128xf32, #tpu.memory_space<vmem>>, vector<1x8x128xf32>
    %251 = vector.shape_cast %250 : vector<1x8x128xf32> to vector<8x128xf32>
    %c13_128 = arith.constant 13 : index
    %c0_129 = arith.constant 0 : index
    %c0_130 = arith.constant 0 : index
    %252 = vector.load %arg2[%c13_128, %c0_129, %c0_130] : memref<25x8x128xf32, #tpu.memory_space<vmem>>, vector<1x8x128xf32>
    %253 = vector.shape_cast %252 : vector<1x8x128xf32> to vector<8x128xf32>
    %254 = arith.subf %251, %253 : vector<8x128xf32>
    %255 = arith.mulf %254, %254 : vector<8x128xf32>
    %256 = arith.addf %249, %255 : vector<8x128xf32>
    %c19 = arith.constant 19 : index
    %c0_131 = arith.constant 0 : index
    %c0_132 = arith.constant 0 : index
    %257 = vector.load %arg1[%c19, %c0_131, %c0_132] : memref<30x8x128xf32, #tpu.memory_space<vmem>>, vector<1x8x128xf32>
    %258 = vector.shape_cast %257 : vector<1x8x128xf32> to vector<8x128xf32>
    %c14_133 = arith.constant 14 : index
    %c0_134 = arith.constant 0 : index
    %c0_135 = arith.constant 0 : index
    %259 = vector.load %arg2[%c14_133, %c0_134, %c0_135] : memref<25x8x128xf32, #tpu.memory_space<vmem>>, vector<1x8x128xf32>
    %260 = vector.shape_cast %259 : vector<1x8x128xf32> to vector<8x128xf32>
    %261 = arith.subf %258, %260 : vector<8x128xf32>
    %262 = arith.mulf %261, %261 : vector<8x128xf32>
    %263 = arith.addf %256, %262 : vector<8x128xf32>
    %c20 = arith.constant 20 : index
    %c0_136 = arith.constant 0 : index
    %c0_137 = arith.constant 0 : index
    %264 = vector.load %arg1[%c20, %c0_136, %c0_137] : memref<30x8x128xf32, #tpu.memory_space<vmem>>, vector<1x8x128xf32>
    %265 = vector.shape_cast %264 : vector<1x8x128xf32> to vector<8x128xf32>
    %c15_138 = arith.constant 15 : index
    %c0_139 = arith.constant 0 : index
    %c0_140 = arith.constant 0 : index
    %266 = vector.load %arg2[%c15_138, %c0_139, %c0_140] : memref<25x8x128xf32, #tpu.memory_space<vmem>>, vector<1x8x128xf32>
    %267 = vector.shape_cast %266 : vector<1x8x128xf32> to vector<8x128xf32>
    %268 = arith.subf %265, %267 : vector<8x128xf32>
    %269 = arith.mulf %268, %268 : vector<8x128xf32>
    %270 = arith.addf %263, %269 : vector<8x128xf32>
    %c21 = arith.constant 21 : index
    %c0_141 = arith.constant 0 : index
    %c0_142 = arith.constant 0 : index
    %271 = vector.load %arg1[%c21, %c0_141, %c0_142] : memref<30x8x128xf32, #tpu.memory_space<vmem>>, vector<1x8x128xf32>
    %272 = vector.shape_cast %271 : vector<1x8x128xf32> to vector<8x128xf32>
    %c16_143 = arith.constant 16 : index
    %c0_144 = arith.constant 0 : index
    %c0_145 = arith.constant 0 : index
    %273 = vector.load %arg2[%c16_143, %c0_144, %c0_145] : memref<25x8x128xf32, #tpu.memory_space<vmem>>, vector<1x8x128xf32>
    %274 = vector.shape_cast %273 : vector<1x8x128xf32> to vector<8x128xf32>
    %275 = arith.subf %272, %274 : vector<8x128xf32>
    %276 = arith.mulf %275, %275 : vector<8x128xf32>
    %277 = arith.addf %270, %276 : vector<8x128xf32>
    %c22 = arith.constant 22 : index
    %c0_146 = arith.constant 0 : index
    %c0_147 = arith.constant 0 : index
    %278 = vector.load %arg1[%c22, %c0_146, %c0_147] : memref<30x8x128xf32, #tpu.memory_space<vmem>>, vector<1x8x128xf32>
    %279 = vector.shape_cast %278 : vector<1x8x128xf32> to vector<8x128xf32>
    %c17_148 = arith.constant 17 : index
    %c0_149 = arith.constant 0 : index
    %c0_150 = arith.constant 0 : index
    %280 = vector.load %arg2[%c17_148, %c0_149, %c0_150] : memref<25x8x128xf32, #tpu.memory_space<vmem>>, vector<1x8x128xf32>
    %281 = vector.shape_cast %280 : vector<1x8x128xf32> to vector<8x128xf32>
    %282 = arith.subf %279, %281 : vector<8x128xf32>
    %283 = arith.mulf %282, %282 : vector<8x128xf32>
    %284 = arith.addf %277, %283 : vector<8x128xf32>
    %c23 = arith.constant 23 : index
    %c0_151 = arith.constant 0 : index
    %c0_152 = arith.constant 0 : index
    %285 = vector.load %arg1[%c23, %c0_151, %c0_152] : memref<30x8x128xf32, #tpu.memory_space<vmem>>, vector<1x8x128xf32>
    %286 = vector.shape_cast %285 : vector<1x8x128xf32> to vector<8x128xf32>
    %c18_153 = arith.constant 18 : index
    %c0_154 = arith.constant 0 : index
    %c0_155 = arith.constant 0 : index
    %287 = vector.load %arg2[%c18_153, %c0_154, %c0_155] : memref<25x8x128xf32, #tpu.memory_space<vmem>>, vector<1x8x128xf32>
    %288 = vector.shape_cast %287 : vector<1x8x128xf32> to vector<8x128xf32>
    %289 = arith.subf %286, %288 : vector<8x128xf32>
    %290 = arith.mulf %289, %289 : vector<8x128xf32>
    %291 = arith.addf %284, %290 : vector<8x128xf32>
    %c24 = arith.constant 24 : index
    %c0_156 = arith.constant 0 : index
    %c0_157 = arith.constant 0 : index
    %292 = vector.load %arg1[%c24, %c0_156, %c0_157] : memref<30x8x128xf32, #tpu.memory_space<vmem>>, vector<1x8x128xf32>
    %293 = vector.shape_cast %292 : vector<1x8x128xf32> to vector<8x128xf32>
    %c19_158 = arith.constant 19 : index
    %c0_159 = arith.constant 0 : index
    %c0_160 = arith.constant 0 : index
    %294 = vector.load %arg2[%c19_158, %c0_159, %c0_160] : memref<25x8x128xf32, #tpu.memory_space<vmem>>, vector<1x8x128xf32>
    %295 = vector.shape_cast %294 : vector<1x8x128xf32> to vector<8x128xf32>
    %296 = arith.subf %293, %295 : vector<8x128xf32>
    %297 = arith.mulf %296, %296 : vector<8x128xf32>
    %298 = arith.addf %291, %297 : vector<8x128xf32>
    %c25 = arith.constant 25 : index
    %c0_161 = arith.constant 0 : index
    %c0_162 = arith.constant 0 : index
    %299 = vector.load %arg1[%c25, %c0_161, %c0_162] : memref<30x8x128xf32, #tpu.memory_space<vmem>>, vector<1x8x128xf32>
    %300 = vector.shape_cast %299 : vector<1x8x128xf32> to vector<8x128xf32>
    %c20_163 = arith.constant 20 : index
    %c0_164 = arith.constant 0 : index
    %c0_165 = arith.constant 0 : index
    %301 = vector.load %arg2[%c20_163, %c0_164, %c0_165] : memref<25x8x128xf32, #tpu.memory_space<vmem>>, vector<1x8x128xf32>
    %302 = vector.shape_cast %301 : vector<1x8x128xf32> to vector<8x128xf32>
    %303 = arith.subf %300, %302 : vector<8x128xf32>
    %304 = arith.mulf %303, %303 : vector<8x128xf32>
    %305 = arith.addf %298, %304 : vector<8x128xf32>
    %c26 = arith.constant 26 : index
    %c0_166 = arith.constant 0 : index
    %c0_167 = arith.constant 0 : index
    %306 = vector.load %arg1[%c26, %c0_166, %c0_167] : memref<30x8x128xf32, #tpu.memory_space<vmem>>, vector<1x8x128xf32>
    %307 = vector.shape_cast %306 : vector<1x8x128xf32> to vector<8x128xf32>
    %c21_168 = arith.constant 21 : index
    %c0_169 = arith.constant 0 : index
    %c0_170 = arith.constant 0 : index
    %308 = vector.load %arg2[%c21_168, %c0_169, %c0_170] : memref<25x8x128xf32, #tpu.memory_space<vmem>>, vector<1x8x128xf32>
    %309 = vector.shape_cast %308 : vector<1x8x128xf32> to vector<8x128xf32>
    %310 = arith.subf %307, %309 : vector<8x128xf32>
    %311 = arith.mulf %310, %310 : vector<8x128xf32>
    %312 = arith.addf %305, %311 : vector<8x128xf32>
    %c27 = arith.constant 27 : index
    %c0_171 = arith.constant 0 : index
    %c0_172 = arith.constant 0 : index
    %313 = vector.load %arg1[%c27, %c0_171, %c0_172] : memref<30x8x128xf32, #tpu.memory_space<vmem>>, vector<1x8x128xf32>
    %314 = vector.shape_cast %313 : vector<1x8x128xf32> to vector<8x128xf32>
    %c22_173 = arith.constant 22 : index
    %c0_174 = arith.constant 0 : index
    %c0_175 = arith.constant 0 : index
    %315 = vector.load %arg2[%c22_173, %c0_174, %c0_175] : memref<25x8x128xf32, #tpu.memory_space<vmem>>, vector<1x8x128xf32>
    %316 = vector.shape_cast %315 : vector<1x8x128xf32> to vector<8x128xf32>
    %317 = arith.subf %314, %316 : vector<8x128xf32>
    %318 = arith.mulf %317, %317 : vector<8x128xf32>
    %319 = arith.addf %312, %318 : vector<8x128xf32>
    %c28 = arith.constant 28 : index
    %c0_176 = arith.constant 0 : index
    %c0_177 = arith.constant 0 : index
    %320 = vector.load %arg1[%c28, %c0_176, %c0_177] : memref<30x8x128xf32, #tpu.memory_space<vmem>>, vector<1x8x128xf32>
    %321 = vector.shape_cast %320 : vector<1x8x128xf32> to vector<8x128xf32>
    %c23_178 = arith.constant 23 : index
    %c0_179 = arith.constant 0 : index
    %c0_180 = arith.constant 0 : index
    %322 = vector.load %arg2[%c23_178, %c0_179, %c0_180] : memref<25x8x128xf32, #tpu.memory_space<vmem>>, vector<1x8x128xf32>
    %323 = vector.shape_cast %322 : vector<1x8x128xf32> to vector<8x128xf32>
    %324 = arith.subf %321, %323 : vector<8x128xf32>
    %325 = arith.mulf %324, %324 : vector<8x128xf32>
    %326 = arith.addf %319, %325 : vector<8x128xf32>
    %c29 = arith.constant 29 : index
    %c0_181 = arith.constant 0 : index
    %c0_182 = arith.constant 0 : index
    %327 = vector.load %arg1[%c29, %c0_181, %c0_182] : memref<30x8x128xf32, #tpu.memory_space<vmem>>, vector<1x8x128xf32>
    %328 = vector.shape_cast %327 : vector<1x8x128xf32> to vector<8x128xf32>
    %c24_183 = arith.constant 24 : index
    %c0_184 = arith.constant 0 : index
    %c0_185 = arith.constant 0 : index
    %329 = vector.load %arg2[%c24_183, %c0_184, %c0_185] : memref<25x8x128xf32, #tpu.memory_space<vmem>>, vector<1x8x128xf32>
    %330 = vector.shape_cast %329 : vector<1x8x128xf32> to vector<8x128xf32>
    %331 = arith.subf %328, %330 : vector<8x128xf32>
    %332 = arith.mulf %331, %331 : vector<8x128xf32>
    %333 = arith.addf %326, %332 : vector<8x128xf32>
    %334 = arith.mulf %1, %1 : vector<8x128xf32>
    %335 = arith.mulf %334, %333 : vector<8x128xf32>
    %336 = arith.addf %192, %335 : vector<8x128xf32>
    %337 = vector.shape_cast %336 : vector<8x128xf32> to vector<1x8x128xf32>
    %cst_186 = arith.constant dense<0.000000e+00> : vector<8x128xf32>
    %338 = vector.multi_reduction <add>, %337, %cst_186 [0] : vector<1x8x128xf32> to vector<8x128xf32>
    %c0_187 = arith.constant 0 : index
    %c0_188 = arith.constant 0 : index
    %c0_189 = arith.constant 0 : index
    %339 = vector.load %arg3[%c0_187, %c0_188, %c0_189] : memref<1x8x128xf32, #tpu.memory_space<vmem>>, vector<1x8x128xf32>
    %340 = vector.shape_cast %339 : vector<1x8x128xf32> to vector<8x128xf32>
    %341 = vector.shape_cast %338 : vector<8x128xf32> to vector<1x8x128xf32>
    tpu.vector_store %arg3[%c0_187, %c0_188, %c0_189], %341 {strides = array<i32>} : memref<1x8x128xf32, #tpu.memory_space<vmem>>, vector<1x8x128xf32>,
    return
  }
  func.func @transform_0(%arg0: i32) -> (i32, i32, i32) {
    %c0_i32 = arith.constant 0 : i32
    %c0_i32_0 = arith.constant 0 : i32
    %c0_i32_1 = arith.constant 0 : i32
    return %c0_i32, %arg0, %c0_i32_0 : i32, i32, i32
  }
  func.func @transform_1(%arg0: i32) -> (i32, i32, i32) {
    %c0_i32 = arith.constant 0 : i32
    %c0_i32_0 = arith.constant 0 : i32
    %c0_i32_1 = arith.constant 0 : i32
    return %c0_i32, %arg0, %c0_i32_0 : i32, i32, i32
  }
  func.func @transform_2(%arg0: i32) -> (i32, i32, i32) {
    %c0_i32 = arith.constant 0 : i32
    %c0_i32_0 = arith.constant 0 : i32
    %c0_i32_1 = arith.constant 0 : i32
    return %arg0, %c0_i32, %c0_i32_0 : i32, i32, i32
  }
}

</mosaic_0001>

<llo_original>
// kernel: yolo_loss.1
$region0: #{yolo_loss.1}
  #allocation0 [shape = 'u32[]', space=smem, size = 0x4, offset = 0x4, fixed_abs, tag = 'smem constant byte address 0x4 - core index']
  #allocation1 [shape = 'u32[144,128]{1,0:T(1,128)}', space=vmem, size = 0x12000, scoped, tag = 'internal scratch']
  %s0 = inlined_call_operand.vmem [shape: f32[30,8,128], index: 0, kind: input, shape index: {}]
  %s1 = inlined_call_operand.vmem [shape: f32[25,8,128], index: 1, kind: input, shape index: {}]
  %s2 = inlined_call_operand.vmem [shape: f32[1,8,128], index: 2, kind: output, shape index: {}]
  %s3 = sld [smem:[#allocation0]]
  $region18: #{yolo_loss.1} parent=0
    _
  %s5 = ssub.s32 1, %s3
  %s6 = scalar_select 0, %s5, %s3
  // Predicated region
  $region2: #{yolo_loss.1} parent=0 // pred_check
    _
  $region3: #{yolo_loss.1} parent=0 // pred_check_branch
    %8 = sbr.rel (0) target = $region5
  $region4: #{yolo_loss.1} parent=0 // pred_region
    _
  $region5: #{yolo_loss.1} parent=0 // pred_fallthru
    _
  // Predicated region
  $region6: #{yolo_loss.1} parent=0 // pred_check
    _
  $region7: #{yolo_loss.1} parent=0 // pred_check_branch
    %10 = sbr.rel (0) target = $region9
  $region8: #{yolo_loss.1} parent=0 // pred_region
    _
  $region9: #{yolo_loss.1} parent=0 // pred_fallthru
    _
  %s11 = scalar_lea.vmem %s1, 8
  %v12 = vld [vmem:[%s11] sm:$0xff]
  %s13 = scalar_lea.vmem %s1, 16
  %v14 = vld [vmem:[%s13] sm:$0xff]
  %s15 = scalar_lea.vmem %s1, 24
  %v16 = vld [vmem:[%s15] sm:$0xff]
  %s17 = scalar_lea.vmem %s1, 32
  %v18 = vld [vmem:[%s17] sm:$0xff]
  %v19 = vmul.f32 %v16, 0.5
  %v20 = vsub.f32 %v12, %v19
  %v21 = vadd.f32 %v12, %v19
  %v22 = vmul.f32 %v18, 0.5
  %v23 = vsub.f32 %v14, %v22
  %v24 = vadd.f32 %v14, %v22
  %v25 = vsub.f32 %v21, %v20
  %v26 = vsub.f32 %v24, %v23
  %v27 = vmul.f32 %v25, %v26
  %v28 = vand.u32 2147483647, %v27
  %s29 = scalar_lea.vmem %s0, 8
  %v30 = vld [vmem:[%s29] sm:$0xff]
  %s31 = scalar_lea.vmem %s0, 16
  %v32 = vld [vmem:[%s31] sm:$0xff]
  %s33 = scalar_lea.vmem %s0, 24
  %v34 = vld [vmem:[%s33] sm:$0xff]
  %s35 = scalar_lea.vmem %s0, 32
  %v36 = vld [vmem:[%s35] sm:$0xff]
  %v37 = vmul.f32 %v34, 0.5
  %v38 = vsub.f32 %v30, %v37
  %v39 = vadd.f32 %v30, %v37
  %v40 = vmul.f32 %v36, 0.5
  %v41 = vsub.f32 %v32, %v40
  %v42 = vadd.f32 %v32, %v40
  %v43 = vmin.f32 %v39, %v21
  %v44 = vmax.f32 %v38, %v20
  %v45 = vsub.f32 %v43, %v44
  %v46 = vmax.f32 %v45, 0.0
  %v47 = vmin.f32 %v42, %v24
  %v48 = vmax.f32 %v41, %v23
  %v49 = vsub.f32 %v47, %v48
  %v50 = vmax.f32 %v49, 0.0
  %v51 = vmul.f32 %v46, %v50
  %v52 = vsub.f32 %v39, %v38
  %v53 = vsub.f32 %v42, %v41
  %v54 = vmul.f32 %v52, %v53
  %v55 = vand.u32 2147483647, %v54
  %v56 = vadd.f32 %v55, %v28
  %v57 = vsub.f32 %v56, %v51
  %v58 = vadd.f32 %v57, 1e-06
  %s59 = scalar_lea.vmem %s0, 48
  %v60 = vld [vmem:[%s59] sm:$0xff]
  %s61 = scalar_lea.vmem %s0, 56
  %v62 = vld [vmem:[%s61] sm:$0xff]
  %s63 = scalar_lea.vmem %s0, 64
  %v64 = vld [vmem:[%s63] sm:$0xff]
  %s65 = scalar_lea.vmem %s0, 72
  %v66 = vld [vmem:[%s65] sm:$0xff]
  %v67 = vmul.f32 %v64, 0.5
  %v68 = vsub.f32 %v60, %v67
  %v69 = vadd.f32 %v60, %v67
  %v70 = vmul.f32 %v66, 0.5
  %v71 = vsub.f32 %v62, %v70
  %v72 = vadd.f32 %v62, %v70
  %v73 = vmin.f32 %v69, %v21
  %v74 = vmax.f32 %v68, %v20
  %v75 = vsub.f32 %v73, %v74
  %v76 = vmax.f32 %v75, 0.0
  %v77 = vmin.f32 %v72, %v24
  %v78 = vmax.f32 %v71, %v23
  %v79 = vsub.f32 %v77, %v78
  %v80 = vmax.f32 %v79, 0.0
  %v81 = vmul.f32 %v76, %v80
  %v82 = vsub.f32 %v69, %v68
  %v83 = vsub.f32 %v72, %v71
  %v84 = vmul.f32 %v82, %v83
  %v85 = vand.u32 2147483647, %v84
  %v86 = vadd.f32 %v85, %v28
  %v87 = vsub.f32 %v86, %v81
  %v88 = vadd.f32 %v87, 1e-06
  %v89 = vmul.f32 %v81, %v58
  %v90 = vmul.f32 %v51, %v88
  %vm91 = vcmp.gt.f32.partialorder %v89, %v90
  %v92 = vsel %vm91, 1, 0
  %v93 = vld [vmem:[%s1] sm:$0xff]
  %vm94 = vcmp.eq.s32.totalorder %v92, 0
  %v95 = vsel %vm94, 1, 0
  %v96 = vcvt.s32.f32 %v95
  %v97 = vld [vmem:[%s0] sm:$0xff]
  %v98 = vsub.f32 %v97, %v93
  %v99 = vsub.f32 %v30, %v12
  %v100 = vmul.f32 %v96, %v99
  %v101 = vsub.f32 %v32, %v14
  %v102 = vmul.f32 %v96, %v101
  %v103 = vsub.f32 %v34, %v16
  %v104 = vmul.f32 %v96, %v103
  %v105 = vsub.f32 %v36, %v18
  %v106 = vmul.f32 %v96, %v105
  %v107 = vsub.f32 1.0, %v96
  %v108 = vmul.f32 %v107, 0.5
  %v109 = vadd.f32 %v96, %v108
  %v110 = vmul.f32 %v98, %v98
  %v111 = vmul.f32 %v109, %v110
  %v112 = vadd.f32 %v111, 0.0
  %v113 = vmul.f32 %v100, %v100
  %v114 = vmul.f32 %v102, %v102
  %v115 = vadd.f32 %v113, %v114
  %v116 = vmul.f32 %v104, %v104
  %v117 = vadd.f32 %v115, %v116
  %v118 = vmul.f32 %v106, %v106
  %v119 = vadd.f32 %v117, %v118
  %v120 = vmul.f32 %v119, 5.0
  %v121 = vadd.f32 %v112, %v120
  %vm122 = vcmp.eq.s32.totalorder %v92, 1
  %v123 = vsel %vm122, 1, 0
  %v124 = vcvt.s32.f32 %v123
  %s125 = scalar_lea.vmem %s0, 40
  %v126 = vld [vmem:[%s125] sm:$0xff]
  %v127 = vsub.f32 %v126, %v93
  %v128 = vsub.f32 %v60, %v12
  %v129 = vmul.f32 %v124, %v128
  %v130 = vsub.f32 %v62, %v14
  %v131 = vmul.f32 %v124, %v130
  %v132 = vsub.f32 %v64, %v16
  %v133 = vmul.f32 %v124, %v132
  %v134 = vsub.f32 %v66, %v18
  %v135 = vmul.f32 %v124, %v134
  %v136 = vsub.f32 1.0, %v124
  %v137 = vmul.f32 %v136, 0.5
  %v138 = vadd.f32 %v124, %v137
  %v139 = vmul.f32 %v127, %v127
  %v140 = vmul.f32 %v138, %v139
  %v141 = vadd.f32 %v121, %v140
  %v142 = vmul.f32 %v129, %v129
  %v143 = vmul.f32 %v131, %v131
  %v144 = vadd.f32 %v142, %v143
  %v145 = vmul.f32 %v133, %v133
  %v146 = vadd.f32 %v144, %v145
  %v147 = vmul.f32 %v135, %v135
  %v148 = vadd.f32 %v146, %v147
  %v149 = vmul.f32 %v148, 5.0
  %v150 = vadd.f32 %v141, %v149
  %s151 = scalar_lea.vmem %s0, 80
  %v152 = vld [vmem:[%s151] sm:$0xff]
  %s153 = scalar_lea.vmem %s1, 40
  %v154 = vld [vmem:[%s153] sm:$0xff]
  %v155 = vsub.f32 %v152, %v154
  %v156 = vmul.f32 %v155, %v155
  %v157 = vadd.f32 %v156, 0.0
  %s158 = scalar_lea.vmem %s0, 88
  %v159 = vld [vmem:[%s158] sm:$0xff]
  %s160 = scalar_lea.vmem %s1, 48
  %v161 = vld [vmem:[%s160] sm:$0xff]
  %v162 = vsub.f32 %v159, %v161
  %v163 = vmul.f32 %v162, %v162
  %v164 = vadd.f32 %v157, %v163
  %s165 = scalar_lea.vmem %s0, 96
  %v166 = vld [vmem:[%s165] sm:$0xff]
  %s167 = scalar_lea.vmem %s1, 56
  %v168 = vld [vmem:[%s167] sm:$0xff]
  %v169 = vsub.f32 %v166, %v168
  %v170 = vmul.f32 %v169, %v169
  %v171 = vadd.f32 %v164, %v170
  %s172 = scalar_lea.vmem %s0, 104
  %v173 = vld [vmem:[%s172] sm:$0xff]
  %s174 = scalar_lea.vmem %s1, 64
  %v175 = vld [vmem:[%s174] sm:$0xff]
  %v176 = vsub.f32 %v173, %v175
  %v177 = vmul.f32 %v176, %v176
  %v178 = vadd.f32 %v171, %v177
  %s179 = scalar_lea.vmem %s0, 112
  %v180 = vld [vmem:[%s179] sm:$0xff]
  %s181 = scalar_lea.vmem %s1, 72
  %v182 = vld [vmem:[%s181] sm:$0xff]
  %v183 = vsub.f32 %v180, %v182
  %v184 = vmul.f32 %v183, %v183
  %v185 = vadd.f32 %v178, %v184
  %s186 = scalar_lea.vmem %s0, 120
  %v187 = vld [vmem:[%s186] sm:$0xff]
  %s188 = scalar_lea.vmem %s1, 80
  %v189 = vld [vmem:[%s188] sm:$0xff]
  %v190 = vsub.f32 %v187, %v189
  %v191 = vmul.f32 %v190, %v190
  %v192 = vadd.f32 %v185, %v191
  %s193 = scalar_lea.vmem %s0, 128
  %v194 = vld [vmem:[%s193] sm:$0xff]
  %s195 = scalar_lea.vmem %s1, 88
  %v196 = vld [vmem:[%s195] sm:$0xff]
  %v197 = vsub.f32 %v194, %v196
  %v198 = vmul.f32 %v197, %v197
  %v199 = vadd.f32 %v192, %v198
  %s200 = scalar_lea.vmem %s0, 136
  %v201 = vld [vmem:[%s200] sm:$0xff]
  %s202 = scalar_lea.vmem %s1, 96
  %v203 = vld [vmem:[%s202] sm:$0xff]
  %v204 = vsub.f32 %v201, %v203
  %v205 = vmul.f32 %v204, %v204
  %v206 = vadd.f32 %v199, %v205
  %s207 = scalar_lea.vmem %s0, 144
  %v208 = vld [vmem:[%s207] sm:$0xff]
  %s209 = scalar_lea.vmem %s1, 104
  %v210 = vld [vmem:[%s209] sm:$0xff]
  %v211 = vsub.f32 %v208, %v210
  %v212 = vmul.f32 %v211, %v211
  %v213 = vadd.f32 %v206, %v212
  %s214 = scalar_lea.vmem %s0, 152
  %v215 = vld [vmem:[%s214] sm:$0xff]
  %s216 = scalar_lea.vmem %s1, 112
  %v217 = vld [vmem:[%s216] sm:$0xff]
  %v218 = vsub.f32 %v215, %v217
  %v219 = vmul.f32 %v218, %v218
  %v220 = vadd.f32 %v213, %v219
  %s221 = scalar_lea.vmem %s0, 160
  %v222 = vld [vmem:[%s221] sm:$0xff]
  %s223 = scalar_lea.vmem %s1, 120
  %v224 = vld [vmem:[%s223] sm:$0xff]
  %v225 = vsub.f32 %v222, %v224
  %v226 = vmul.f32 %v225, %v225
  %v227 = vadd.f32 %v220, %v226
  %s228 = scalar_lea.vmem %s0, 168
  %v229 = vld [vmem:[%s228] sm:$0xff]
  %s230 = scalar_lea.vmem %s1, 128
  %v231 = vld [vmem:[%s230] sm:$0xff]
  %v232 = vsub.f32 %v229, %v231
  %v233 = vmul.f32 %v232, %v232
  %v234 = vadd.f32 %v227, %v233
  %s235 = scalar_lea.vmem %s0, 176
  %v236 = vld [vmem:[%s235] sm:$0xff]
  %s237 = scalar_lea.vmem %s1, 136
  %v238 = vld [vmem:[%s237] sm:$0xff]
  %v239 = vsub.f32 %v236, %v238
  %v240 = vmul.f32 %v239, %v239
  %v241 = vadd.f32 %v234, %v240
  %s242 = scalar_lea.vmem %s0, 184
  %v243 = vld [vmem:[%s242] sm:$0xff]
  %s244 = scalar_lea.vmem %s1, 144
  %v245 = vld [vmem:[%s244] sm:$0xff]
  %v246 = vsub.f32 %v243, %v245
  %v247 = vmul.f32 %v246, %v246
  %v248 = vadd.f32 %v241, %v247
  %s249 = scalar_lea.vmem %s0, 192
  %v250 = vld [vmem:[%s249] sm:$0xff]
  %s251 = scalar_lea.vmem %s1, 152
  %v252 = vld [vmem:[%s251] sm:$0xff]
  %v253 = vsub.f32 %v250, %v252
  %v254 = vmul.f32 %v253, %v253
  %v255 = vadd.f32 %v248, %v254
  %s256 = scalar_lea.vmem %s0, 200
  %v257 = vld [vmem:[%s256] sm:$0xff]
  %s258 = scalar_lea.vmem %s1, 160
  %v259 = vld [vmem:[%s258] sm:$0xff]
  %v260 = vsub.f32 %v257, %v259
  %v261 = vmul.f32 %v260, %v260
  %v262 = vadd.f32 %v255, %v261
  %s263 = scalar_lea.vmem %s0, 208
  %v264 = vld [vmem:[%s263] sm:$0xff]
  %s265 = scalar_lea.vmem %s1, 168
  %v266 = vld [vmem:[%s265] sm:$0xff]
  %v267 = vsub.f32 %v264, %v266
  %v268 = vmul.f32 %v267, %v267
  %v269 = vadd.f32 %v262, %v268
  %s270 = scalar_lea.vmem %s0, 216
  %v271 = vld [vmem:[%s270] sm:$0xff]
  %s272 = scalar_lea.vmem %s1, 176
  %v273 = vld [vmem:[%s272] sm:$0xff]
  %v274 = vsub.f32 %v271, %v273
  %v275 = vmul.f32 %v274, %v274
  %v276 = vadd.f32 %v269, %v275
  %s277 = scalar_lea.vmem %s0, 224
  %v278 = vld [vmem:[%s277] sm:$0xff]
  %s279 = scalar_lea.vmem %s1, 184
  %v280 = vld [vmem:[%s279] sm:$0xff]
  %v281 = vsub.f32 %v278, %v280
  %v282 = vmul.f32 %v281, %v281
  %v283 = vadd.f32 %v276, %v282
  %s284 = scalar_lea.vmem %s0, 232
  %v285 = vld [vmem:[%s284] sm:$0xff]
  %s286 = scalar_lea.vmem %s1, 192
  %v287 = vld [vmem:[%s286] sm:$0xff]
  %v288 = vsub.f32 %v285, %v287
  %v289 = vmul.f32 %v288, %v288
  %v290 = vadd.f32 %v283, %v289
  %v291 = vmul.f32 %v12, %v12
  %v292 = vmul.f32 %v291, %v290
  %v293 = vadd.f32 %v150, %v292
  %v294 = vadd.f32 %v293, 0.0
  %295 = vst [vmem:[%s2] sm:$0xff] %v294
  // Predicated region
  $region10: #{yolo_loss.1} parent=0 // pred_check
    _
  $region11: #{yolo_loss.1} parent=0 // pred_check_branch
    %297 = sbr.rel (0) target = $region13
  $region12: #{yolo_loss.1} parent=0 // pred_region
    _
  $region13: #{yolo_loss.1} parent=0 // pred_fallthru
    _
  // Predicated region
  $region14: #{yolo_loss.1} parent=0 // pred_check
    _
  $region15: #{yolo_loss.1} parent=0 // pred_check_branch
    %299 = sbr.rel (0) target = $region17
  $region16: #{yolo_loss.1} parent=0 // pred_region
    _
  $region17: #{yolo_loss.1} parent=0 // pred_fallthru
    _

</llo_original>
